<compile_context>
chip_gen: v5e
topology: v5e:2x2
jax: 0.10.0
libtpu: 0.0.40
codegen_flags: <defaults>
</compile_context>

<pallas_src>
import jax
import jax.numpy as jnp
from jax.experimental import pallas as pl
from jax.experimental.pallas import tpu as pltpu


def _identity_kernel(x_ref, o_ref):
    # Whole-tile copy: the only "compute" Identity has.
    o_ref[...] = x_ref[...]


# ~2 MiB per block: double-buffered in + out = 4 blocks = 8 MiB, which fits
# every generation's default scoped VMEM and already sits at the HBM roofline.
_TARGET_BLOCK_BYTES = 2 * 1024 * 1024


def _copy_slab(slab: jax.Array, tile_r: int, lane: int, rows: int) -> jax.Array:
    n_bytes = slab.size * slab.dtype.itemsize
    grid = (pl.cdiv(rows, tile_r),)
    return pl.pallas_call(
        _identity_kernel,
        out_shape=jax.ShapeDtypeStruct(slab.shape, slab.dtype),
        grid_spec=pltpu.PrefetchScalarGridSpec(
            num_scalar_prefetch=0,
            grid=grid,
            in_specs=[pl.BlockSpec((tile_r, lane), lambda i: (i, 0))],
            out_specs=pl.BlockSpec((tile_r, lane), lambda i: (i, 0)),
        ),
        compiler_params=pltpu.CompilerParams(
            dimension_semantics=("parallel",),
        ),
        cost_estimate=pl.CostEstimate(
            flops=0, transcendentals=0, bytes_accessed=2 * n_bytes
        ),
        # Lets XLA reuse the input HBM buffer for the output (true in-place
        # pass when the caller donates x; otherwise XLA keeps it correct with
        # at most the same single copy it would have done anyway).
        input_output_aliases={0: 0},
    )(slab)


def identity_pallas(x: jax.Array) -> jax.Array:
    """y = x, computed via a Pallas TPU copy kernel."""
    if x.size == 0:
        return x

    orig_shape = x.shape
    itemsize = x.dtype.itemsize
    # Minimum sublane tile is dtype-dependent: 8 (f32), 16 (bf16/f16), 32 (i8/fp8).
    sub = max(8, (8 * 4) // itemsize)
    n = x.size

    # ---- choose a lane-dense 2-D slab layout (widest lane first) -----------
    lane = None
    for cand in (1024, 512, 256, 128):
        if n % cand == 0:
            lane = cand
            break

    if lane is not None:
        # Fast path: pure reshape, no padding, no trailing slice.
        rows = n // lane
        slab = x.reshape(rows, lane)
        padded = False
    else:
        # Rare fallback for awkward sizes: pad flat up to a (sub, 128) multiple.
        lane = 128
        chunk = sub * lane
        n_pad = pl.cdiv(n, chunk) * chunk
        flat = jnp.pad(x.reshape(-1), (0, n_pad - n))
        rows = n_pad // lane
        slab = flat.reshape(rows, lane)
        padded = True

    # ---- tile selection (byte budget, dtype-aware rounding, cdiv grid) -----
    tile_r = _TARGET_BLOCK_BYTES // (lane * itemsize)
    if tile_r >= rows:
        tile_r = rows  # single block covering the full extent is always legal
    else:
        tile_r = max(sub, (tile_r // sub) * sub)

    out = _copy_slab(slab, tile_r, lane, rows)

    if padded:
        out = out.reshape(-1)[:n]
    return out.reshape(orig_shape)


if __name__ == "__main__":
    key = jax.random.PRNGKey(0)
    # Small NCHW-style input consistent with the module's typical use.
    x = jax.random.normal(key, (2, 4, 16, 16), dtype=jnp.float32)

    identity_fn = jax.jit(identity_pallas)
    y = identity_fn(x)
    jax.block_until_ready(y)

    assert y.shape == x.shape and y.dtype == x.dtype
    assert bool(jnp.all(y == x))
    print("KERNEL_OK")
</pallas_src>

<mosaic_0001>
module attributes {stable_mosaic.version = 11 : i64} {
  func.func @_identity_kernel(%arg0: i32, %arg1: memref<2x1024xf32, #tpu.memory_space<vmem>>, %arg2: memref<2x1024xf32, #tpu.memory_space<vmem>>) attributes {dimension_semantics = [#tpu.dimension_semantics<parallel>], iteration_bounds = array<i64: 1>, scalar_prefetch = 0 : i64, scratch_operands = 0 : i64, tpu.core_type = #tpu.core_type<tc>, window_params = [{transform_indices = @transform_0, window_bounds = array<i64: 2, 1024>}, {transform_indices = @transform_1, window_bounds = array<i64: 2, 1024>}]} {
    %c0 = arith.constant 0 : index
    %c0_0 = arith.constant 0 : index
    %0 = vector.load %arg1[%c0, %c0_0] : memref<2x1024xf32, #tpu.memory_space<vmem>>, vector<2x1024xf32>
    %c0_1 = arith.constant 0 : index
    %c0_2 = arith.constant 0 : index
    %1 = vector.load %arg2[%c0_1, %c0_2] : memref<2x1024xf32, #tpu.memory_space<vmem>>, vector<2x1024xf32>
    tpu.vector_store %arg2[%c0_1, %c0_2], %0 {strides = array<i32>} : memref<2x1024xf32, #tpu.memory_space<vmem>>, vector<2x1024xf32>,
    return
  }
  func.func @transform_0(%arg0: i32) -> (i32, i32) {
    %c0_i32 = arith.constant 0 : i32
    %c0_i32_0 = arith.constant 0 : i32
    return %arg0, %c0_i32 : i32, i32
  }
  func.func @transform_1(%arg0: i32) -> (i32, i32) {
    %c0_i32 = arith.constant 0 : i32
    %c0_i32_0 = arith.constant 0 : i32
    return %arg0, %c0_i32 : i32, i32
  }
}

</mosaic_0001>

<llo_original>
// kernel: identity_pallas.1
$region0: #{identity_pallas.1}
  #allocation0 [shape = 'u32[]', space=smem, size = 0x4, offset = 0x4, fixed_abs, tag = 'smem constant byte address 0x4 - core index']
  #allocation1 [shape = 'u32[72,128]{1,0:T(1,128)}', space=vmem, size = 0x9000, scoped, tag = 'internal scratch']
  %s0 = inlined_call_operand.vmem [shape: f32[2,1024], index: 0, kind: input, shape index: {}, may-alias: {0,1}]
  %s1 = inlined_call_operand.vmem [shape: f32[2,1024], index: 1, kind: output, shape index: {}, may-alias: {0,1}]
  %s2 = sld [smem:[#allocation0]]
  $region14: #{identity_pallas.1} parent=0
    _
  %s4 = ssub.s32 1, %s2
  %s5 = scalar_select 0, %s4, %s2
  // Predicated region
  $region2: #{identity_pallas.1} parent=0 // pred_check
    _
  $region3: #{identity_pallas.1} parent=0 // pred_check_branch
    %7 = sbr.rel (0) target = $region5
  $region4: #{identity_pallas.1} parent=0 // pred_region
    _
  $region5: #{identity_pallas.1} parent=0 // pred_fallthru
    _
  %v8 = vld [vmem:[%s0] sm:$0xff]
  %v9 = vld [vmem:[%s0 + $0x8] sm:$0xff]
  %10 = vst [vmem:[%s1] sm:$0xff] %v8
  %11 = vst [vmem:[%s1 + $0x8] sm:$0xff] %v9
  // Predicated region
  $region6: #{identity_pallas.1} parent=0 // pred_check
    _
  $region7: #{identity_pallas.1} parent=0 // pred_check_branch
    %13 = sbr.rel (0) target = $region9
  $region8: #{identity_pallas.1} parent=0 // pred_region
    _
  $region9: #{identity_pallas.1} parent=0 // pred_fallthru
    _
  // Predicated region
  $region10: #{identity_pallas.1} parent=0 // pred_check
    _
  $region11: #{identity_pallas.1} parent=0 // pred_check_branch
    %15 = sbr.rel (0) target = $region13
  $region12: #{identity_pallas.1} parent=0 // pred_region
    _
  $region13: #{identity_pallas.1} parent=0 // pred_fallthru
    _

</llo_original>
